<compile_context>
chip_gen: v5e
topology: v5e:2x2
jax: 0.10.0
libtpu: 0.0.40
codegen_flags: <defaults>
</compile_context>

<pallas_src>
import jax
import jax.numpy as jnp
from jax.experimental import pallas as pl
from jax.experimental.pallas import tpu as pltpu

EPS = 1e-5
LANE = 128
TM_MAX = 512
TK_MAX = 512
VMEM_LIMIT = 48 * 1024 * 1024  # > 16/32 MiB scoped defaults, fits v7x's 64 MiB


def _round_up(x, m):
    return (x + m - 1) // m * m


# ----------------------------- Pallas kernels ------------------------------

def mm_stats_kernel(a_ref, w_ref, y_ref, st_ref, acc_ref):
    """y = A @ W (bf16 x bf16 -> f32 accumulate over the K grid axis), plus
    per-M-tile per-channel sum and sum-of-squares for the two-pass BN."""
    k = pl.program_id(1)

    @pl.when(k == 0)
    def _():
        acc_ref[...] = jnp.zeros_like(acc_ref)

    acc_ref[...] += jnp.dot(a_ref[...], w_ref[...],
                            preferred_element_type=jnp.float32)

    @pl.when(k == pl.num_programs(1) - 1)
    def _():
        y = acc_ref[...]
        y_ref[...] = y
        s = jnp.sum(y, axis=0, keepdims=True)        # (1, Cp)
        ss = jnp.sum(y * y, axis=0, keepdims=True)   # (1, Cp)
        rows = jax.lax.broadcasted_iota(jnp.int32, (8, 1), 0)
        st = jnp.where(rows == 0, s, jnp.where(rows == 1, ss, jnp.zeros_like(s)))
        st_ref[...] = st[None]                       # (1, 8, Cp)


def bn_relu_kernel(y_ref, p_ref, o_ref):
    """o = relu(y * scale + shift); p_ref rows = [scale; shift]. f32 math."""
    y = y_ref[...]
    o_ref[...] = jnp.maximum(y * p_ref[0:1, :] + p_ref[1:2, :],
                             0.0).astype(o_ref.dtype)


def bn_add_bn_relu_kernel(y_ref, sc_ref, p_ref, psc_ref, o_ref):
    """o = relu(BN(y) + BN(sc)) with precomputed per-channel scale/shift."""
    a = y_ref[...] * p_ref[0:1, :] + p_ref[1:2, :]
    b = sc_ref[...] * psc_ref[0:1, :] + psc_ref[1:2, :]
    o_ref[...] = jnp.maximum(a + b, 0.0).astype(o_ref.dtype)


# --------------------------- pallas_call wrappers ---------------------------

def matmul_stats(a, w, tm, tk):
    mp, kp = a.shape
    cp = w.shape[1]
    nm, nk = mp // tm, kp // tk
    return pl.pallas_call(
        mm_stats_kernel,
        out_shape=(jax.ShapeDtypeStruct((mp, cp), jnp.float32),
                   jax.ShapeDtypeStruct((nm, 8, cp), jnp.float32)),
        grid_spec=pltpu.PrefetchScalarGridSpec(
            num_scalar_prefetch=0,
            grid=(nm, nk),
            in_specs=[pl.BlockSpec((tm, tk), lambda i, k: (i, k)),
                      pl.BlockSpec((tk, cp), lambda i, k: (k, 0))],
            out_specs=(pl.BlockSpec((tm, cp), lambda i, k: (i, 0)),
                       pl.BlockSpec((1, 8, cp), lambda i, k: (i, 0, 0))),
            scratch_shapes=[pltpu.VMEM((tm, cp), jnp.float32)]),
        compiler_params=pltpu.CompilerParams(
            dimension_semantics=("parallel", "arbitrary"),
            vmem_limit_bytes=VMEM_LIMIT),
    )(a, w)


def bn_relu(y, p, tm, out_dtype):
    mp, cp = y.shape
    nm = mp // tm
    return pl.pallas_call(
        bn_relu_kernel,
        out_shape=jax.ShapeDtypeStruct((mp, cp), out_dtype),
        grid_spec=pltpu.PrefetchScalarGridSpec(
            num_scalar_prefetch=0, grid=(nm,),
            in_specs=[pl.BlockSpec((tm, cp), lambda i: (i, 0)),
                      pl.BlockSpec((2, cp), lambda i: (0, 0))],
            out_specs=pl.BlockSpec((tm, cp), lambda i: (i, 0))),
        compiler_params=pltpu.CompilerParams(
            dimension_semantics=("parallel",),
            vmem_limit_bytes=VMEM_LIMIT),
    )(y, p)


def bn_add_bn_relu(y, sc, p, psc, tm, out_dtype):
    mp, cp = y.shape
    nm = mp // tm
    return pl.pallas_call(
        bn_add_bn_relu_kernel,
        out_shape=jax.ShapeDtypeStruct((mp, cp), out_dtype),
        grid_spec=pltpu.PrefetchScalarGridSpec(
            num_scalar_prefetch=0, grid=(nm,),
            in_specs=[pl.BlockSpec((tm, cp), lambda i: (i, 0)),
                      pl.BlockSpec((tm, cp), lambda i: (i, 0)),
                      pl.BlockSpec((2, cp), lambda i: (0, 0)),
                      pl.BlockSpec((2, cp), lambda i: (0, 0))],
            out_specs=pl.BlockSpec((tm, cp), lambda i: (i, 0))),
        compiler_params=pltpu.CompilerParams(
            dimension_semantics=("parallel",),
            vmem_limit_bytes=VMEM_LIMIT),
    )(y, sc, p, psc)


# ------------------------------- JAX glue ----------------------------------

def im2col(x_nhwc, kh, kw, stride, pad):
    """Extract (kh,kw) patches -> (N*Ho*Wo, kh*kw*C) with (i,j,C) ordering."""
    n, h, w, c = x_nhwc.shape
    xp = jnp.pad(x_nhwc, ((0, 0), (pad, pad), (pad, pad), (0, 0)))
    ho = (h + 2 * pad - kh) // stride + 1
    wo = (w + 2 * pad - kw) // stride + 1
    cols = []
    for i in range(kh):
        for j in range(kw):
            cols.append(xp[:, i:i + stride * ho:stride, j:j + stride * wo:stride, :])
    a = jnp.concatenate(cols, axis=-1)  # (n, ho, wo, kh*kw*c)
    return a.reshape(n * ho * wo, kh * kw * c), (n, ho, wo)


def _pad2(a, rows, cols):
    return jnp.pad(a, ((0, rows - a.shape[0]), (0, cols - a.shape[1])))


def _bn_params(st, m_true, gamma, beta, cp):
    """Reduce per-tile partial stats -> per-channel (scale, shift) in f32."""
    sums = jnp.sum(st[:, 0, :], axis=0)
    sumsq = jnp.sum(st[:, 1, :], axis=0)
    mean = sums / m_true
    # clamp: E[y^2]-mu^2 can go slightly negative in f32 (cancellation)
    var = jnp.maximum(sumsq / m_true - mean * mean, 0.0)
    g = jnp.pad(gamma.astype(jnp.float32), (0, cp - gamma.shape[0]))
    b = jnp.pad(beta.astype(jnp.float32), (0, cp - beta.shape[0]))
    scale = g * jax.lax.rsqrt(var + EPS)
    shift = b - mean * scale
    return jnp.stack([scale, shift], axis=0)  # (2, cp)


def basic_block_forward(x_nchw, params, stride):
    x = jnp.transpose(x_nchw, (0, 2, 3, 1)).astype(jnp.float32)  # NHWC
    n, h, w, cin = x.shape
    planes = params['w1'].shape[-1]
    cp = _round_up(planes, LANE)                   # lane-dense output channels

    ho = (h + 2 - 3) // stride + 1
    wo = (w + 2 - 3) // stride + 1
    m = n * ho * wo                                # same M for conv1/conv2/shortcut
    tm = min(TM_MAX, _round_up(m, LANE))
    mp = _round_up(m, tm)

    def conv_pass1(a, w_hwio, k):
        tk = min(TK_MAX, _round_up(k, LANE))
        kp = _round_up(k, tk)
        a_p = _pad2(a, mp, kp).astype(jnp.bfloat16)
        w_p = _pad2(w_hwio.reshape(k, -1).astype(jnp.float32), kp, cp
                    ).astype(jnp.bfloat16)
        return matmul_stats(a_p, w_p, tm, tk)

    # ---- conv1 (3x3, stride, pad=1) + bn1 + relu ---------------------------
    a1, _ = im2col(x.astype(jnp.bfloat16), 3, 3, stride, 1)
    y1, st1 = conv_pass1(a1, params['w1'], 9 * cin)
    p1 = _bn_params(st1, m, params['g1'], params['b1'], cp)
    out1 = bn_relu(y1, p1, tm, jnp.bfloat16)                       # (mp, cp)
    out1_nhwc = out1[:m, :planes].reshape(n, ho, wo, planes)

    # ---- shortcut: identity or 1x1 conv (stride) + bn ----------------------
    if stride != 1 or cin != planes:
        xs = x[:, ::stride, ::stride, :].reshape(m, cin)
        ysc, stsc = conv_pass1(xs, params['wsc'], cin)
        psc = _bn_params(stsc, m, params['gsc'], params['bsc'], cp)
        sc = ysc                                                    # (mp, cp) f32
    else:
        sc = _pad2(x.reshape(m, cin), mp, cp)
        psc = jnp.stack([jnp.ones((cp,), jnp.float32),
                         jnp.zeros((cp,), jnp.float32)], axis=0)

    # ---- conv2 (3x3, s=1, pad=1) + bn2 + shortcut BN + add + relu (fused) --
    a2, _ = im2col(out1_nhwc, 3, 3, 1, 1)
    y2, st2 = conv_pass1(a2, params['w2'], 9 * planes)
    p2 = _bn_params(st2, m, params['g2'], params['b2'], cp)
    out = bn_add_bn_relu(y2, sc, p2, psc, tm, jnp.float32)

    out_nhwc = out[:m, :planes].reshape(n, ho, wo, planes)
    return jnp.transpose(out_nhwc, (0, 3, 1, 2))  # back to NCHW


# -------------------------- pure-JAX reference ------------------------------

def ref_forward(x_nchw, params, stride):
    x = jnp.transpose(x_nchw, (0, 2, 3, 1)).astype(jnp.float32)

    def conv(z, wt, s, pad):
        return jax.lax.conv_general_dilated(
            z, wt, (s, s), ((pad, pad), (pad, pad)),
            dimension_numbers=('NHWC', 'HWIO', 'NHWC'))

    def bn(y, g, b):
        mu = jnp.mean(y, axis=(0, 1, 2), keepdims=True)
        var = jnp.mean((y - mu) ** 2, axis=(0, 1, 2), keepdims=True)
        return (y - mu) / jnp.sqrt(var + EPS) * g + b

    cin = x.shape[-1]
    planes = params['w1'].shape[-1]
    out = jax.nn.relu(bn(conv(x, params['w1'], stride, 1), params['g1'], params['b1']))
    out = bn(conv(out, params['w2'], 1, 1), params['g2'], params['b2'])
    if stride != 1 or cin != planes:
        sc = bn(conv(x, params['wsc'], stride, 0), params['gsc'], params['bsc'])
    else:
        sc = x
    out = jax.nn.relu(out + sc)
    return jnp.transpose(out, (0, 3, 1, 2))


# --------------------------------- main -------------------------------------

if __name__ == "__main__":
    key = jax.random.PRNGKey(0)
    in_planes, planes, stride = 4, 8, 2   # exercises the projection shortcut
    N, H, W = 2, 16, 16
    ks = jax.random.split(key, 10)

    x = jax.random.normal(ks[0], (N, in_planes, H, W), jnp.float32)
    params = {
        'w1':  jax.random.normal(ks[1], (3, 3, in_planes, planes), jnp.float32) * 0.1,
        'g1':  jax.random.uniform(ks[2], (planes,), jnp.float32, 0.5, 1.5),
        'b1':  jax.random.normal(ks[3], (planes,), jnp.float32) * 0.1,
        'w2':  jax.random.normal(ks[4], (3, 3, planes, planes), jnp.float32) * 0.1,
        'g2':  jax.random.uniform(ks[5], (planes,), jnp.float32, 0.5, 1.5),
        'b2':  jax.random.normal(ks[6], (planes,), jnp.float32) * 0.1,
        'wsc': jax.random.normal(ks[7], (1, 1, in_planes, planes), jnp.float32) * 0.1,
        'gsc': jax.random.uniform(ks[8], (planes,), jnp.float32, 0.5, 1.5),
        'bsc': jax.random.normal(ks[9], (planes,), jnp.float32) * 0.1,
    }

    out = basic_block_forward(x, params, stride)
    jax.block_until_ready(out)

    assert out.shape == (N, planes, H // stride, W // stride), out.shape
    ref = ref_forward(x, params, stride)
    err = float(jnp.max(jnp.abs(out - ref)))
    # bf16 MXU operands (per perf review) => slightly looser tolerance than f32
    assert err < 1e-1, f"max abs err vs reference: {err}"
    print("KERNEL_OK")
</pallas_src>

<mosaic_0001>
module attributes {stable_mosaic.version = 11 : i64} {
  func.func @mm_stats_kernel(%arg0: i32, %arg1: i32, %arg2: memref<128x128xbf16, #tpu.memory_space<vmem>>, %arg3: memref<128x128xbf16, #tpu.memory_space<vmem>>, %arg4: memref<128x128xf32, #tpu.memory_space<vmem>>, %arg5: memref<1x8x128xf32, #tpu.memory_space<vmem>>, %arg6: memref<128x128xf32, #tpu.memory_space<vmem>>) attributes {dimension_semantics = [#tpu.dimension_semantics<parallel>, #tpu.dimension_semantics<arbitrary>], iteration_bounds = array<i64: 1, 1>, scalar_prefetch = 0 : i64, scratch_operands = 1 : i64, tpu.core_type = #tpu.core_type<tc>, window_params = [{transform_indices = @transform_0, window_bounds = array<i64: 128, 128>}, {transform_indices = @transform_1, window_bounds = array<i64: 128, 128>}, {transform_indices = @transform_2, window_bounds = array<i64: 128, 128>}, {transform_indices = @transform_3, window_bounds = array<i64: 1, 8, 128>}]} {
    %c0_i32 = arith.constant 0 : i32
    %0 = arith.cmpi eq, %arg1, %c0_i32 : i32
    %1 = arith.extui %0 : i1 to i32
    %c0_i32_0 = arith.constant 0 : i32
    %2 = arith.cmpi ne, %1, %c0_i32_0 : i32
    scf.if %2 {
      %cst_10 = arith.constant 0.000000e+00 : f32
      %12 = vector.broadcast %cst_10 : f32 to vector<128x128xf32>
      %c0_11 = arith.constant 0 : index
      %c0_12 = arith.constant 0 : index
      %13 = vector.load %arg6[%c0_11, %c0_12] : memref<128x128xf32, #tpu.memory_space<vmem>>, vector<128x128xf32>
      tpu.vector_store %arg6[%c0_11, %c0_12], %12 {strides = array<i32>} : memref<128x128xf32, #tpu.memory_space<vmem>>, vector<128x128xf32>,
    } else {
    }
    %c0 = arith.constant 0 : index
    %c0_1 = arith.constant 0 : index
    %3 = vector.load %arg6[%c0, %c0_1] : memref<128x128xf32, #tpu.memory_space<vmem>>, vector<128x128xf32>
    %c0_2 = arith.constant 0 : index
    %c0_3 = arith.constant 0 : index
    %4 = vector.load %arg2[%c0_2, %c0_3] : memref<128x128xbf16, #tpu.memory_space<vmem>>, vector<128x128xbf16>
    %c0_4 = arith.constant 0 : index
    %c0_5 = arith.constant 0 : index
    %5 = vector.load %arg3[%c0_4, %c0_5] : memref<128x128xbf16, #tpu.memory_space<vmem>>, vector<128x128xbf16>
    %cst = arith.constant dense<0.000000e+00> : vector<128x128xf32>
    %6 = tpu.matmul %4, %5, %cst {dimension_numbers = #tpu.dot_dimension_numbers<[1], [0], [0], [1], [0, 0, 1, 1], [], []>} : vector<128x128xbf16>, vector<128x128xbf16>, vector<128x128xf32> -> vector<128x128xf32>
    %7 = arith.addf %3, %6 : vector<128x128xf32>
    %c0_6 = arith.constant 0 : index
    %c0_7 = arith.constant 0 : index
    %8 = vector.load %arg6[%c0_6, %c0_7] : memref<128x128xf32, #tpu.memory_space<vmem>>, vector<128x128xf32>
    tpu.vector_store %arg6[%c0_6, %c0_7], %7 {strides = array<i32>} : memref<128x128xf32, #tpu.memory_space<vmem>>, vector<128x128xf32>,
    %c0_i32_8 = arith.constant 0 : i32
    %9 = arith.cmpi eq, %arg1, %c0_i32_8 : i32
    %10 = arith.extui %9 : i1 to i32
    %c0_i32_9 = arith.constant 0 : i32
    %11 = arith.cmpi ne, %10, %c0_i32_9 : i32
    scf.if %11 {
      %c0_10 = arith.constant 0 : index
      %c0_11 = arith.constant 0 : index
      %12 = vector.load %arg6[%c0_10, %c0_11] : memref<128x128xf32, #tpu.memory_space<vmem>>, vector<128x128xf32>
      %c0_12 = arith.constant 0 : index
      %c0_13 = arith.constant 0 : index
      %13 = vector.load %arg4[%c0_12, %c0_13] : memref<128x128xf32, #tpu.memory_space<vmem>>, vector<128x128xf32>
      tpu.vector_store %arg4[%c0_12, %c0_13], %12 {strides = array<i32>} : memref<128x128xf32, #tpu.memory_space<vmem>>, vector<128x128xf32>,
      %cst_14 = arith.constant dense<0.000000e+00> : vector<128xf32>
      %14 = vector.multi_reduction <add>, %12, %cst_14 [0] : vector<128x128xf32> to vector<128xf32>
      %15 = vector.shape_cast %14 : vector<128xf32> to vector<1x128xf32>
      %16 = arith.mulf %12, %12 : vector<128x128xf32>
      %cst_15 = arith.constant dense<0.000000e+00> : vector<128xf32>
      %17 = vector.multi_reduction <add>, %16, %cst_15 [0] : vector<128x128xf32> to vector<128xf32>
      %18 = vector.shape_cast %17 : vector<128xf32> to vector<1x128xf32>
      %19 = tpu.iota {dimensions = array<i32: 0>} : vector<8x1xi32>
      %c0_i32_16 = arith.constant 0 : i32
      %20 = vector.broadcast %c0_i32_16 : i32 to vector<8x1xi32>
      %21 = arith.cmpi eq, %19, %20 : vector<8x1xi32>
      %c1_i32 = arith.constant 1 : i32
      %22 = vector.broadcast %c1_i32 : i32 to vector<8x1xi32>
      %23 = arith.cmpi eq, %19, %22 : vector<8x1xi32>
      %cst_17 = arith.constant 0.000000e+00 : f32
      %24 = vector.broadcast %cst_17 : f32 to vector<1x128xf32>
      %25 = vector.shape_cast %23 : vector<8x1xi1> to vector<8x1xi1>
      %26 = vector.broadcast %25 : vector<8x1xi1> to vector<8x128xi1>
      %27 = vector.shape_cast %18 : vector<1x128xf32> to vector<1x128xf32>
      %28 = vector.broadcast %27 : vector<1x128xf32> to vector<8x128xf32>
      %29 = vector.shape_cast %24 : vector<1x128xf32> to vector<1x128xf32>
      %30 = vector.broadcast %29 : vector<1x128xf32> to vector<8x128xf32>
      %31 = arith.select %26, %28, %30 : vector<8x128xi1>, vector<8x128xf32>
      %32 = vector.shape_cast %21 : vector<8x1xi1> to vector<8x1xi1>
      %33 = vector.broadcast %32 : vector<8x1xi1> to vector<8x128xi1>
      %34 = vector.shape_cast %15 : vector<1x128xf32> to vector<1x128xf32>
      %35 = vector.broadcast %34 : vector<1x128xf32> to vector<8x128xf32>
      %36 = arith.select %33, %35, %31 : vector<8x128xi1>, vector<8x128xf32>
      %37 = vector.shape_cast %36 : vector<8x128xf32> to vector<1x8x128xf32>
      %c0_18 = arith.constant 0 : index
      %c0_19 = arith.constant 0 : index
      %c0_20 = arith.constant 0 : index
      %38 = vector.load %arg5[%c0_18, %c0_19, %c0_20] : memref<1x8x128xf32, #tpu.memory_space<vmem>>, vector<1x8x128xf32>
      tpu.vector_store %arg5[%c0_18, %c0_19, %c0_20], %37 {strides = array<i32>} : memref<1x8x128xf32, #tpu.memory_space<vmem>>, vector<1x8x128xf32>,
    } else {
    }
    return
  }
  func.func @transform_0(%arg0: i32, %arg1: i32) -> (i32, i32) {
    %c0_i32 = arith.constant 0 : i32
    return %arg0, %arg1 : i32, i32
  }
  func.func @transform_1(%arg0: i32, %arg1: i32) -> (i32, i32) {
    %c0_i32 = arith.constant 0 : i32
    %c0_i32_0 = arith.constant 0 : i32
    return %arg1, %c0_i32 : i32, i32
  }
  func.func @transform_2(%arg0: i32, %arg1: i32) -> (i32, i32) {
    %c0_i32 = arith.constant 0 : i32
    %c0_i32_0 = arith.constant 0 : i32
    return %arg0, %c0_i32 : i32, i32
  }
  func.func @transform_3(%arg0: i32, %arg1: i32) -> (i32, i32, i32) {
    %c0_i32 = arith.constant 0 : i32
    %c0_i32_0 = arith.constant 0 : i32
    %c0_i32_1 = arith.constant 0 : i32
    return %arg0, %c0_i32, %c0_i32_0 : i32, i32, i32
  }
}

</mosaic_0001>

<llo_original>
// kernel: tpu_custom_call.1
$region0: #{tpu_custom_call.1}
  #allocation0 [shape = 'u32[]', space=smem, size = 0x4, offset = 0x4, fixed_abs, tag = 'smem constant byte address 0x4 - core index']
  #allocation1 [shape = 'u32[72,128]{1,0:T(1,128)}', space=vmem, size = 0x9000, scoped, tag = 'internal scratch']
  #allocation2 [shape = 'f32[128,128]{1,0:T(8,128)}', space=vmem, size = 0x10000, scoped, tag = 'scratch operand']
  %s0 = inlined_call_operand.hbm [shape: bf16[128,128], index: 0, kind: input, shape index: {}]
  %s1 = inlined_call_operand.hbm [shape: bf16[128,128], index: 1, kind: input, shape index: {}]
  %s2 = inlined_call_operand.hbm [shape: f32[128,128], index: 2, kind: output, shape index: {0}]
  %s3 = inlined_call_operand.hbm [shape: f32[1,8,128], index: 3, kind: output, shape index: {1}]
  %4 = xla_tuple %s2, %s3
  %s5 = sld [smem:[#allocation0]]
  $region42: #{tpu_custom_call.1} parent=0
    _
  %s7 = ssub.s32 1, %s5
  %s8 = scalar_select 0, %s7, %s5
  $region1: #{tpu_custom_call.1} parent=0
    #allocation3 [shape = 'u8[32768]{0}', space=vmem, size = 0x8000, scoped, tag = 'input window, operand 0, single buffered']
    #allocation4 [shape = 's32[1]{0}', space=sflag, size = 0x4, scoped, tag = 'scoped memory for tpu_custom_call.1']
    #allocation5 [shape = 's32[1]{0}', space=sflag, size = 0x4, scoped, tag = 'scoped memory for tpu_custom_call.1']
    #allocation6 [shape = 'u8[32768]{0}', space=vmem, size = 0x8000, scoped, tag = 'input window, operand 1, single buffered']
    #allocation7 [shape = 's32[1]{0}', space=sflag, size = 0x4, scoped, tag = 'scoped memory for tpu_custom_call.1']
    #allocation8 [shape = 'u8[65536]{0}', space=vmem, size = 0x10000, scoped, tag = 'output window, operand 0, single buffered']
    #allocation9 [shape = 'u8[4096]{0}', space=vmem, size = 0x1000, scoped, tag = 'output window, operand 1, single buffered']
    #allocation10 [shape = 's32[1]{0}', space=sflag, size = 0x4, scoped, tag = 'scoped memory for tpu_custom_call.1']
    %9 = vsyncpa [#allocation4], 0
    %10 = vsyncpa [#allocation7], 0
    %11 = vsyncpa [#allocation5], 0
    %12 = vsyncpa [#allocation10], 0
    // Predicated region
    $region2: #{tpu_custom_call.1} parent=1 // pred_check
      _
    $region3: #{tpu_custom_call.1} parent=1 // pred_check_branch
      %14 = sbr.rel (0) target = $region5
    $region4: #{tpu_custom_call.1} parent=1 // pred_region
      %16 = vsyncadd [#allocation4], 0
      %s17 = sshll.u32 %s0, 4
      %s18 = int_to_ptr.hbm [resolvable:$true] %s17
      %s19 = sshll.u32 [#allocation3], 4
      %s20 = int_to_ptr.vmem [resolvable:$true] %s19
      %25 = dma.hbm_to_vmem [thread:$0]  %s18, 1024, %s20, [#allocation4], 64, 64, 4
    $region5: #{tpu_custom_call.1} parent=1 // pred_fallthru
      _
    // Predicated region
    $region6: #{tpu_custom_call.1} parent=1 // pred_check
      _
    $region7: #{tpu_custom_call.1} parent=1 // pred_check_branch
      %27 = sbr.rel (0) target = $region9
    $region8: #{tpu_custom_call.1} parent=1 // pred_region
      %29 = vsyncadd [#allocation7], 0
      %s30 = sshll.u32 %s1, 4
      %s31 = int_to_ptr.hbm [resolvable:$true] %s30
      %s32 = sshll.u32 [#allocation6], 4
      %s33 = int_to_ptr.vmem [resolvable:$true] %s32
      %38 = dma.hbm_to_vmem [thread:$0]  %s31, 1024, %s33, [#allocation7], 64, 64, 4
    $region9: #{tpu_custom_call.1} parent=1 // pred_fallthru
      _
    // Predicated region
    $region10: #{tpu_custom_call.1} parent=1 // pred_check
      _
    $region11: #{tpu_custom_call.1} parent=1 // pred_check_branch
      %40 = sbr.rel (0) target = $region13
    $region12: #{tpu_custom_call.1} parent=1 // pred_region
      %42 = dma.done [#allocation4], 1024
    $region13: #{tpu_custom_call.1} parent=1 // pred_fallthru
      _
    // Predicated region
    $region14: #{tpu_custom_call.1} parent=1 // pred_check
      _
    $region15: #{tpu_custom_call.1} parent=1 // pred_check_branch
      %44 = sbr.rel (0) target = $region17
    $region16: #{tpu_custom_call.1} parent=1 // pred_region
      %46 = dma.done [#allocation7], 1024
    $region17: #{tpu_custom_call.1} parent=1 // pred_fallthru
      _
    %p47 = scmp.eq.s32.totalorder 0, 0
    // Predicated region
    $region18: #{tpu_custom_call.1} parent=1 // pred_check
      %p48 = pneg %p47
    $region19: #{tpu_custom_call.1} parent=1 // pred_check_branch
      %50 = sbr.rel (%p48) target = $region21
    $region20: #{tpu_custom_call.1} parent=1 // pred_region
      %51 = vst [vmem:[#allocation2] sm:$0xff] 0.0
      %52 = vst [vmem:[#allocation2 + $0x8] sm:$0xff] 0.0
      %53 = vst [vmem:[#allocation2 + $0x10] sm:$0xff] 0.0
      %54 = vst [vmem:[#allocation2 + $0x18] sm:$0xff] 0.0
      %55 = vst [vmem:[#allocation2 + $0x20] sm:$0xff] 0.0
      %56 = vst [vmem:[#allocation2 + $0x28] sm:$0xff] 0.0
      %57 = vst [vmem:[#allocation2 + $0x30] sm:$0xff] 0.0
      %58 = vst [vmem:[#allocation2 + $0x38] sm:$0xff] 0.0
      %59 = vst [vmem:[#allocation2 + $0x40] sm:$0xff] 0.0
      %60 = vst [vmem:[#allocation2 + $0x48] sm:$0xff] 0.0
      %61 = vst [vmem:[#allocation2 + $0x50] sm:$0xff] 0.0
      %62 = vst [vmem:[#allocation2 + $0x58] sm:$0xff] 0.0
      %63 = vst [vmem:[#allocation2 + $0x60] sm:$0xff] 0.0
      %64 = vst [vmem:[#allocation2 + $0x68] sm:$0xff] 0.0
      %65 = vst [vmem:[#allocation2 + $0x70] sm:$0xff] 0.0
      %66 = vst [vmem:[#allocation2 + $0x78] sm:$0xff] 0.0
    $region21: #{tpu_custom_call.1} parent=1 // pred_fallthru
      _
    %v67 = vld [vmem:[#allocation2] sm:$0xff]
    %v68 = vld [vmem:[#allocation2 + $0x8] sm:$0xff]
    %v69 = vld [vmem:[#allocation2 + $0x10] sm:$0xff]
    %v70 = vld [vmem:[#allocation2 + $0x18] sm:$0xff]
    %v71 = vld [vmem:[#allocation2 + $0x20] sm:$0xff]
    %v72 = vld [vmem:[#allocation2 + $0x28] sm:$0xff]
    %v73 = vld [vmem:[#allocation2 + $0x30] sm:$0xff]
    %v74 = vld [vmem:[#allocation2 + $0x38] sm:$0xff]
    %v75 = vld [vmem:[#allocation2 + $0x40] sm:$0xff]
    %v76 = vld [vmem:[#allocation2 + $0x48] sm:$0xff]
    %v77 = vld [vmem:[#allocation2 + $0x50] sm:$0xff]
    %v78 = vld [vmem:[#allocation2 + $0x58] sm:$0xff]
    %v79 = vld [vmem:[#allocation2 + $0x60] sm:$0xff]
    %v80 = vld [vmem:[#allocation2 + $0x68] sm:$0xff]
    %v81 = vld [vmem:[#allocation2 + $0x70] sm:$0xff]
    %v82 = vld [vmem:[#allocation2 + $0x78] sm:$0xff]
    %v83 = vld [vmem:[#allocation3] sm:$0xf]
    %v84 = vld [vmem:[#allocation3 + $0x4] sm:$0xf]
    %v85 = vld [vmem:[#allocation3 + $0x8] sm:$0xf]
    %v86 = vld [vmem:[#allocation3 + $0xc] sm:$0xf]
    %v87 = vld [vmem:[#allocation3 + $0x10] sm:$0xf]
    %v88 = vld [vmem:[#allocation3 + $0x14] sm:$0xf]
    %v89 = vld [vmem:[#allocation3 + $0x18] sm:$0xf]
    %v90 = vld [vmem:[#allocation3 + $0x1c] sm:$0xf]
    %v91 = vld [vmem:[#allocation3 + $0x20] sm:$0xf]
    %v92 = vld [vmem:[#allocation3 + $0x24] sm:$0xf]
    %v93 = vld [vmem:[#allocation3 + $0x28] sm:$0xf]
    %v94 = vld [vmem:[#allocation3 + $0x2c] sm:$0xf]
    %v95 = vld [vmem:[#allocation3 + $0x30] sm:$0xf]
    %v96 = vld [vmem:[#allocation3 + $0x34] sm:$0xf]
    %v97 = vld [vmem:[#allocation3 + $0x38] sm:$0xf]
    %v98 = vld [vmem:[#allocation3 + $0x3c] sm:$0xf]
    %v99 = vld [vmem:[#allocation6] sm:$0xf]
    %v100 = vld [vmem:[#allocation6 + $0x4] sm:$0xf]
    %v101 = vld [vmem:[#allocation6 + $0x8] sm:$0xf]
    %v102 = vld [vmem:[#allocation6 + $0xc] sm:$0xf]
    %v103 = vld [vmem:[#allocation6 + $0x10] sm:$0xf]
    %v104 = vld [vmem:[#allocation6 + $0x14] sm:$0xf]
    %v105 = vld [vmem:[#allocation6 + $0x18] sm:$0xf]
    %v106 = vld [vmem:[#allocation6 + $0x1c] sm:$0xf]
    %v107 = vld [vmem:[#allocation6 + $0x20] sm:$0xf]
    %v108 = vld [vmem:[#allocation6 + $0x24] sm:$0xf]
    %v109 = vld [vmem:[#allocation6 + $0x28] sm:$0xf]
    %v110 = vld [vmem:[#allocation6 + $0x2c] sm:$0xf]
    %v111 = vld [vmem:[#allocation6 + $0x30] sm:$0xf]
    %v112 = vld [vmem:[#allocation6 + $0x34] sm:$0xf]
    %v113 = vld [vmem:[#allocation6 + $0x38] sm:$0xf]
    %v114 = vld [vmem:[#allocation6 + $0x3c] sm:$0xf]
    %v131 = vunpack.c.l.b16 %v83
    %v132 = vunpack.c.l.b16 %v84
    %v133 = vunpack.c.l.b16 %v85
    %v134 = vunpack.c.l.b16 %v86
    %v135 = vunpack.c.l.b16 %v87
    %v136 = vunpack.c.l.b16 %v88
    %v137 = vunpack.c.l.b16 %v89
    %v138 = vunpack.c.l.b16 %v90
    %v139 = vunpack.c.l.b16 %v91
    %v140 = vunpack.c.l.b16 %v92
    %v141 = vunpack.c.l.b16 %v93
    %v142 = vunpack.c.l.b16 %v94
    %v143 = vunpack.c.l.b16 %v95
    %v144 = vunpack.c.l.b16 %v96
    %v145 = vunpack.c.l.b16 %v97
    %v146 = vunpack.c.l.b16 %v98
    %v147 = vpack.c.b16 %v132, %v131
    %v148 = vpack.c.b16 %v134, %v133
    %v149 = vpack.c.b16 %v136, %v135
    %v150 = vpack.c.b16 %v138, %v137
    %v151 = vpack.c.b16 %v140, %v139
    %v152 = vpack.c.b16 %v142, %v141
    %v153 = vpack.c.b16 %v144, %v143
    %v154 = vpack.c.b16 %v146, %v145
    %v179 = vunpack.c.l.b16 %v99
    %v180 = vunpack.c.l.b16 %v100
    %v181 = vunpack.c.l.b16 %v101
    %v182 = vunpack.c.l.b16 %v102
    %v183 = vunpack.c.l.b16 %v103
    %v184 = vunpack.c.l.b16 %v104
    %v185 = vunpack.c.l.b16 %v105
    %v186 = vunpack.c.l.b16 %v106
    %v187 = vunpack.c.l.b16 %v107
    %v188 = vunpack.c.l.b16 %v108
    %v189 = vunpack.c.l.b16 %v109
    %v190 = vunpack.c.l.b16 %v110
    %v191 = vunpack.c.l.b16 %v111
    %v192 = vunpack.c.l.b16 %v112
    %v193 = vunpack.c.l.b16 %v113
    %v194 = vunpack.c.l.b16 %v114
    %v195 = vpack.c.b16 %v180, %v179
    %v196 = vpack.c.b16 %v182, %v181
    %v197 = vpack.c.b16 %v184, %v183
    %v198 = vpack.c.b16 %v186, %v185
    %v199 = vpack.c.b16 %v188, %v187
    %v200 = vpack.c.b16 %v190, %v189
    %v201 = vpack.c.b16 %v192, %v191
    %v202 = vpack.c.b16 %v194, %v193
    %211 = vmatpush.bf16.msra.mxu0 %v202
    %212 = vmatpush.bf16.msra.mxu0 %v201
    %213 = vmatpush.bf16.msra.mxu0 %v200
    %214 = vmatpush.bf16.msra.mxu0 %v199
    %215 = vmatpush.bf16.msra.mxu0 %v198
    %216 = vmatpush.bf16.msra.mxu0 %v197
    %217 = vmatpush.bf16.msra.mxu0 %v196
    %218 = vmatpush.bf16.msra.mxu0 %v195
    %219 = vmatmul.bf16.gmra.mxu0 %v147
    %v220 = vpop.f32.mrf.mxu0
    %v221 = vadd.f32 0.0, %v220
    %v222 = vpop.f32.mrf.mxu0
    %v223 = vadd.f32 0.0, %v222
    %224 = vmatmul.bf16.gmra.mxu0 %v148
    %v225 = vpop.f32.mrf.mxu0
    %v226 = vadd.f32 0.0, %v225
    %v227 = vpop.f32.mrf.mxu0
    %v228 = vadd.f32 0.0, %v227
    %229 = vmatmul.bf16.gmra.mxu0 %v149
    %v230 = vpop.f32.mrf.mxu0
    %v231 = vadd.f32 0.0, %v230
    %v232 = vpop.f32.mrf.mxu0
    %v233 = vadd.f32 0.0, %v232
    %234 = vmatmul.bf16.gmra.mxu0 %v150
    %v235 = vpop.f32.mrf.mxu0
    %v236 = vadd.f32 0.0, %v235
    %v237 = vpop.f32.mrf.mxu0
    %v238 = vadd.f32 0.0, %v237
    %239 = vmatmul.bf16.gmra.mxu0 %v151
    %v240 = vpop.f32.mrf.mxu0
    %v241 = vadd.f32 0.0, %v240
    %v242 = vpop.f32.mrf.mxu0
    %v243 = vadd.f32 0.0, %v242
    %244 = vmatmul.bf16.gmra.mxu0 %v152
    %v245 = vpop.f32.mrf.mxu0
    %v246 = vadd.f32 0.0, %v245
    %v247 = vpop.f32.mrf.mxu0
    %v248 = vadd.f32 0.0, %v247
    %249 = vmatmul.bf16.gmra.mxu0 %v153
    %v250 = vpop.f32.mrf.mxu0
    %v251 = vadd.f32 0.0, %v250
    %v252 = vpop.f32.mrf.mxu0
    %v253 = vadd.f32 0.0, %v252
    %254 = vmatmul.bf16.gmra.mxu0 %v154
    %v255 = vpop.f32.mrf.mxu0
    %v256 = vadd.f32 0.0, %v255
    %v257 = vpop.f32.mrf.mxu0
    %v258 = vadd.f32 0.0, %v257
    %259 = vdwg.mxu0
    %v260 = vadd.f32 %v67, %v221
    %v261 = vadd.f32 %v68, %v223
    %v262 = vadd.f32 %v69, %v226
    %v263 = vadd.f32 %v70, %v228
    %v264 = vadd.f32 %v71, %v231
    %v265 = vadd.f32 %v72, %v233
    %v266 = vadd.f32 %v73, %v236
    %v267 = vadd.f32 %v74, %v238
    %v268 = vadd.f32 %v75, %v241
    %v269 = vadd.f32 %v76, %v243
    %v270 = vadd.f32 %v77, %v246
    %v271 = vadd.f32 %v78, %v248
    %v272 = vadd.f32 %v79, %v251
    %v273 = vadd.f32 %v80, %v253
    %v274 = vadd.f32 %v81, %v256
    %v275 = vadd.f32 %v82, %v258
    %276 = vst [vmem:[#allocation2] sm:$0xff] %v260
    %277 = vst [vmem:[#allocation2 + $0x8] sm:$0xff] %v261
    %278 = vst [vmem:[#allocation2 + $0x10] sm:$0xff] %v262
    %279 = vst [vmem:[#allocation2 + $0x18] sm:$0xff] %v263
    %280 = vst [vmem:[#allocation2 + $0x20] sm:$0xff] %v264
    %281 = vst [vmem:[#allocation2 + $0x28] sm:$0xff] %v265
    %282 = vst [vmem:[#allocation2 + $0x30] sm:$0xff] %v266
    %283 = vst [vmem:[#allocation2 + $0x38] sm:$0xff] %v267
    %284 = vst [vmem:[#allocation2 + $0x40] sm:$0xff] %v268
    %285 = vst [vmem:[#allocation2 + $0x48] sm:$0xff] %v269
    %286 = vst [vmem:[#allocation2 + $0x50] sm:$0xff] %v270
    %287 = vst [vmem:[#allocation2 + $0x58] sm:$0xff] %v271
    %288 = vst [vmem:[#allocation2 + $0x60] sm:$0xff] %v272
    %289 = vst [vmem:[#allocation2 + $0x68] sm:$0xff] %v273
    %290 = vst [vmem:[#allocation2 + $0x70] sm:$0xff] %v274
    %291 = vst [vmem:[#allocation2 + $0x78] sm:$0xff] %v275
    // Predicated region
    $region22: #{tpu_custom_call.1} parent=1 // pred_check
      %p292 = pneg %p47
    $region23: #{tpu_custom_call.1} parent=1 // pred_check_branch
      %294 = sbr.rel (%p292) target = $region25
    $region24: #{tpu_custom_call.1} parent=1 // pred_region
      %v295 = vld [vmem:[#allocation2] sm:$0xff]
      %v296 = vld [vmem:[#allocation2 + $0x8] sm:$0xff]
      %v297 = vld [vmem:[#allocation2 + $0x10] sm:$0xff]
      %v298 = vld [vmem:[#allocation2 + $0x18] sm:$0xff]
      %v299 = vld [vmem:[#allocation2 + $0x20] sm:$0xff]
      %v300 = vld [vmem:[#allocation2 + $0x28] sm:$0xff]
      %v301 = vld [vmem:[#allocation2 + $0x30] sm:$0xff]
      %v302 = vld [vmem:[#allocation2 + $0x38] sm:$0xff]
      %v303 = vld [vmem:[#allocation2 + $0x40] sm:$0xff]
      %v304 = vld [vmem:[#allocation2 + $0x48] sm:$0xff]
      %v305 = vld [vmem:[#allocation2 + $0x50] sm:$0xff]
      %v306 = vld [vmem:[#allocation2 + $0x58] sm:$0xff]
      %v307 = vld [vmem:[#allocation2 + $0x60] sm:$0xff]
      %v308 = vld [vmem:[#allocation2 + $0x68] sm:$0xff]
      %v309 = vld [vmem:[#allocation2 + $0x70] sm:$0xff]
      %v310 = vld [vmem:[#allocation2 + $0x78] sm:$0xff]
      %311 = vst [vmem:[#allocation8] sm:$0xff] %v295
      %312 = vst [vmem:[#allocation8 + $0x8] sm:$0xff] %v296
      %313 = vst [vmem:[#allocation8 + $0x10] sm:$0xff] %v297
      %314 = vst [vmem:[#allocation8 + $0x18] sm:$0xff] %v298
      %315 = vst [vmem:[#allocation8 + $0x20] sm:$0xff] %v299
      %316 = vst [vmem:[#allocation8 + $0x28] sm:$0xff] %v300
      %317 = vst [vmem:[#allocation8 + $0x30] sm:$0xff] %v301
      %318 = vst [vmem:[#allocation8 + $0x38] sm:$0xff] %v302
      %319 = vst [vmem:[#allocation8 + $0x40] sm:$0xff] %v303
      %320 = vst [vmem:[#allocation8 + $0x48] sm:$0xff] %v304
      %321 = vst [vmem:[#allocation8 + $0x50] sm:$0xff] %v305
      %322 = vst [vmem:[#allocation8 + $0x58] sm:$0xff] %v306
      %323 = vst [vmem:[#allocation8 + $0x60] sm:$0xff] %v307
      %324 = vst [vmem:[#allocation8 + $0x68] sm:$0xff] %v308
      %325 = vst [vmem:[#allocation8 + $0x70] sm:$0xff] %v309
      %326 = vst [vmem:[#allocation8 + $0x78] sm:$0xff] %v310
      %v327 = vadd.f32 %v295, %v296
      %v328 = vadd.f32 %v327, %v297
      %v329 = vadd.f32 %v328, %v298
      %v330 = vadd.f32 %v329, %v299
      %v331 = vadd.f32 %v330, %v300
      %v332 = vadd.f32 %v331, %v301
      %v333 = vadd.f32 %v332, %v302
      %v334 = vadd.f32 %v333, %v303
      %v335 = vadd.f32 %v334, %v304
      %v336 = vadd.f32 %v335, %v305
      %v337 = vadd.f32 %v336, %v306
      %v338 = vadd.f32 %v337, %v307
      %v339 = vadd.f32 %v338, %v308
      %v340 = vadd.f32 %v339, %v309
      %v341 = vadd.f32 %v340, %v310
      %v342 = vrot.slane %v341, 4
      %v343 = vadd.f32 %v341, %v342
      %v344 = vrot.slane %v343, 2
      %v345 = vadd.f32 %v343, %v344
      %v346 = vrot.slane %v345, 1
      %v347 = vadd.f32 %v345, %v346
      %v348 = vmul.f32 %v295, %v295
      %v349 = vmul.f32 %v296, %v296
      %v350 = vmul.f32 %v297, %v297
      %v351 = vmul.f32 %v298, %v298
      %v352 = vmul.f32 %v299, %v299
      %v353 = vmul.f32 %v300, %v300
      %v354 = vmul.f32 %v301, %v301
      %v355 = vmul.f32 %v302, %v302
      %v356 = vmul.f32 %v303, %v303
      %v357 = vmul.f32 %v304, %v304
      %v358 = vmul.f32 %v305, %v305
      %v359 = vmul.f32 %v306, %v306
      %v360 = vmul.f32 %v307, %v307
      %v361 = vmul.f32 %v308, %v308
      %v362 = vmul.f32 %v309, %v309
      %v363 = vmul.f32 %v310, %v310
      %v364 = vadd.f32 %v348, %v349
      %v365 = vadd.f32 %v364, %v350
      %v366 = vadd.f32 %v365, %v351
      %v367 = vadd.f32 %v366, %v352
      %v368 = vadd.f32 %v367, %v353
      %v369 = vadd.f32 %v368, %v354
      %v370 = vadd.f32 %v369, %v355
      %v371 = vadd.f32 %v370, %v356
      %v372 = vadd.f32 %v371, %v357
      %v373 = vadd.f32 %v372, %v358
      %v374 = vadd.f32 %v373, %v359
      %v375 = vadd.f32 %v374, %v360
      %v376 = vadd.f32 %v375, %v361
      %v377 = vadd.f32 %v376, %v362
      %v378 = vadd.f32 %v377, %v363
      %v379 = vrot.slane %v378, 4
      %v380 = vadd.f32 %v378, %v379
      %v381 = vrot.slane %v380, 2
      %v382 = vadd.f32 %v380, %v381
      %v383 = vrot.slane %v382, 1
      %v384 = vadd.f32 %v382, %v383
      %v385 = vlaneseq
      %v386 = vshrl.u32 %v385, 7
      %vm387 = vcmp.eq.s32.totalorder %v386, 0
      %vm388 = vcmp.eq.s32.totalorder %v386, 1
      %v389 = vsel %vm388, 1, 0
      %vm390 = vcmp.eq.s32.totalorder %v389, 1
      %v391 = vsel %vm390, %v384, 0.0
      %v392 = vsel %vm387, 1, 0
      %vm393 = vcmp.eq.s32.totalorder %v392, 1
      %v394 = vsel %vm393, %v347, %v391
      %395 = vst [vmem:[#allocation9] sm:$0xff] %v394
    $region25: #{tpu_custom_call.1} parent=1 // pred_fallthru
      _
    // Predicated region
    $region26: #{tpu_custom_call.1} parent=1 // pred_check
      _
    $region27: #{tpu_custom_call.1} parent=1 // pred_check_branch
      %397 = sbr.rel (0) target = $region29
    $region28: #{tpu_custom_call.1} parent=1 // pred_region
      %399 = vsyncadd [#allocation5], 0
      %s400 = sshll.u32 [#allocation8], 4
      %s401 = int_to_ptr.vmem [resolvable:$true] %s400
      %s402 = sshll.u32 %s2, 4
      %s403 = int_to_ptr.hbm [resolvable:$true] %s402
      %408 = dma.vmem_to_hbm [thread:$0]  %s401, 2048, %s403, [#allocation5], 128, 128, 8
    $region29: #{tpu_custom_call.1} parent=1 // pred_fallthru
      _
    // Predicated region
    $region30: #{tpu_custom_call.1} parent=1 // pred_check
      _
    $region31: #{tpu_custom_call.1} parent=1 // pred_check_branch
      %410 = sbr.rel (0) target = $region33
    $region32: #{tpu_custom_call.1} parent=1 // pred_region
      %412 = vsyncadd [#allocation10], 0
      %s414 = sshll.u32 [#allocation9], 4
      %s415 = int_to_ptr.vmem [resolvable:$true] %s414
      %s416 = sshll.u32 %s3, 4
      %s417 = int_to_ptr.hbm [resolvable:$true] %s416
      %419 = dma.vmem_to_hbm [thread:$0]  %s415, 128, %s417, [#allocation10]
    $region33: #{tpu_custom_call.1} parent=1 // pred_fallthru
      _
    // Predicated region
    $region34: #{tpu_custom_call.1} parent=1 // pred_check
      _
    $region35: #{tpu_custom_call.1} parent=1 // pred_check_branch
      %421 = sbr.rel (0) target = $region37
    $region36: #{tpu_custom_call.1} parent=1 // pred_region
      %423 = dma.done [#allocation5], 2048
    $region37: #{tpu_custom_call.1} parent=1 // pred_fallthru
      _
    // Predicated region
    $region38: #{tpu_custom_call.1} parent=1 // pred_check
      _
    $region39: #{tpu_custom_call.1} parent=1 // pred_check_branch
      %425 = sbr.rel (0) target = $region41
    $region40: #{tpu_custom_call.1} parent=1 // pred_region
      %427 = dma.done [#allocation10], 128
    $region41: #{tpu_custom_call.1} parent=1 // pred_fallthru
      _
    %428 = vsyncpa [#allocation4], 1
    %429 = vsyncpa [#allocation7], 1
    %430 = vsyncpa [#allocation5], 1
    %431 = vsyncpa [#allocation10], 1

</llo_original>
